<compile_context>
chip_gen: v7x
topology: tpu7x:2x2x1
jax: 0.10.0
libtpu: 0.0.40
codegen_flags: <defaults>
</compile_context>

<pallas_src>
import functools

import jax
import jax.numpy as jnp
from jax.experimental import pallas as pl
from jax.experimental.pallas import tpu as pltpu


# ----------------------------------------------------------------------------- #
# Helpers
# ----------------------------------------------------------------------------- #
def _round_up(x: int, m: int) -> int:
    return (x + m - 1) // m * m


def _apply_activation(name: str, x):
    name = name.lower()
    if name == "relu":
        return jnp.maximum(x, 0.0)
    if name == "tanh":
        return jnp.tanh(x)
    if name == "gelu":
        return jax.nn.gelu(x)
    raise ValueError(f"unsupported activation: {name}")


# ----------------------------------------------------------------------------- #
# Kernel
# ----------------------------------------------------------------------------- #
def mlp_chain_kernel(plan, obs_ref, z_ref, *refs):
    """Runs the preprocessor + forward-model MLP chain on one batch tile.

    plan: static tuple of ops:
        ("linear_split",)  -> 3 params (W_obs, W_z, b): first layer, concat fused
        ("linear",)        -> 2 params (W, b)
        ("layernorm",)     -> 2 params (gamma, beta)
        ("tanh",) / ("act", name)
    refs: param refs in plan order, followed by the output ref.
    """
    out_ref = refs[-1]
    params = refs[:-1]

    h = None
    i = 0
    for op in plan:
        kind = op[0]
        if kind == "linear_split":
            w_obs = params[i][...]
            w_z = params[i + 1][...]
            b = params[i + 2][...]
            i += 3
            h = (
                jnp.dot(obs_ref[...].astype(jnp.float32), w_obs,
                        preferred_element_type=jnp.float32)
                + jnp.dot(z_ref[...].astype(jnp.float32), w_z,
                          preferred_element_type=jnp.float32)
                + b
            )
        elif kind == "linear":
            w = params[i][...]
            b = params[i + 1][...]
            i += 2
            h = jnp.dot(h, w, preferred_element_type=jnp.float32) + b
        elif kind == "layernorm":
            g = params[i][...]
            beta = params[i + 1][...]
            i += 2
            # Single-pass statistics: var = E[x^2] - mu^2 (clamped at 0).
            inv_n = 1.0 / h.shape[-1]
            mu = jnp.sum(h, axis=-1, keepdims=True) * inv_n
            var = jnp.maximum(
                jnp.sum(h * h, axis=-1, keepdims=True) * inv_n - mu * mu, 0.0)
            h = (h - mu) * (jax.lax.rsqrt(var + 1e-5) * g) + beta
        elif kind == "tanh":
            h = jnp.tanh(h)
        elif kind == "act":
            h = _apply_activation(op[1], h)
        else:
            raise ValueError(kind)
    out_ref[...] = h.astype(out_ref.dtype)


# ----------------------------------------------------------------------------- #
# Parameter construction (deterministic, synthetic)
# ----------------------------------------------------------------------------- #
def _linear_params(key, fan_in, fan_out):
    kw, kb = jax.random.split(key)
    scale = 1.0 / jnp.sqrt(jnp.float32(fan_in))
    w = jax.random.uniform(kw, (fan_in, fan_out), jnp.float32, -scale, scale)
    b = jax.random.uniform(kb, (1, fan_out), jnp.float32, -scale, scale)
    return w, b


def build_state_forward_representation(
    key,
    *,
    observation_length,
    preprocessor_hidden_dimension,
    preprocessor_feature_space_dimension,
    preprocessor_hidden_layers,
    preprocessor_activation,
    number_of_features,
    z_dimension,
    forward_hidden_dimension,
    forward_hidden_layers,
    forward_activation,
):
    """Returns (plan, flat_param_list, z_dimension).  Plan/params are the
    un-split, un-padded 'reference' form (first op is a plain linear over the
    concatenated [obs, z] input); the wrapper rewrites it for the kernel."""
    plan = []
    flat = []
    keys = iter(jax.random.split(key, 64))

    def add_linear(fan_in, fan_out):
        w, b = _linear_params(next(keys), fan_in, fan_out)
        plan.append(("linear",))
        flat.extend([w, b])

    # ---- AbstractPreprocessor(obs_len + z_dim -> F), preprocessor=True ----
    in_dim = observation_length + z_dimension
    add_linear(in_dim, preprocessor_hidden_dimension)
    plan.append(("layernorm",))
    flat.extend([jnp.ones((1, preprocessor_hidden_dimension), jnp.float32),
                 jnp.zeros((1, preprocessor_hidden_dimension), jnp.float32)])
    plan.append(("tanh",))
    for _ in range(preprocessor_hidden_layers - 1):
        add_linear(preprocessor_hidden_dimension, preprocessor_hidden_dimension)
        plan.append(("act", preprocessor_activation))
    add_linear(preprocessor_hidden_dimension, preprocessor_feature_space_dimension)

    # ---- ForwardModel(F * (number_of_features - 1) -> z_dim) ----
    fwd_in = preprocessor_feature_space_dimension * (number_of_features - 1)
    add_linear(fwd_in, forward_hidden_dimension)
    plan.append(("act", forward_activation))
    for _ in range(forward_hidden_layers - 1):
        add_linear(forward_hidden_dimension, forward_hidden_dimension)
        plan.append(("act", forward_activation))
    add_linear(forward_hidden_dimension, z_dimension)

    return tuple(plan), flat, z_dimension


# ----------------------------------------------------------------------------- #
# Wrapper
# ----------------------------------------------------------------------------- #
def state_forward_representation(observation, z, plan, flat_params, z_dimension):
    batch, obs_len = observation.shape
    z_len = z.shape[1]

    # Batch tile: largest of (<=512, multiple of 8, <= padded batch).
    TB = min(512, _round_up(batch, 8))
    B_pad = _round_up(batch, TB)
    if B_pad != batch:
        observation = jnp.pad(observation, ((0, B_pad - batch), (0, 0)))
        z = jnp.pad(z, ((0, B_pad - batch), (0, 0)))

    # Fuse the torch.cat([obs, z], -1) into the first Linear by splitting W1.
    w1, b1 = flat_params[0], flat_params[1]
    kernel_params = [w1[:obs_len], w1[obs_len:], b1] + list(flat_params[2:])
    kernel_plan = (("linear_split",),) + tuple(plan[1:])

    # Lane-dense output: zero-pad the final Linear out to a multiple of 128.
    out_pad = _round_up(max(z_dimension, 128), 128)
    w_last, b_last = kernel_params[-2], kernel_params[-1]
    kernel_params[-2] = jnp.pad(w_last, ((0, 0), (0, out_pad - z_dimension)))
    kernel_params[-1] = jnp.pad(b_last, ((0, 0), (0, out_pad - z_dimension)))

    grid = (B_pad // TB,)
    in_specs = (
        [pl.BlockSpec((TB, obs_len), lambda i: (i, 0)),
         pl.BlockSpec((TB, z_len), lambda i: (i, 0))]
        # Constant index_map -> weights/biases stay VMEM-resident (one DMA).
        + [pl.BlockSpec(p.shape, lambda i: (0, 0)) for p in kernel_params]
    )
    out_specs = pl.BlockSpec((TB, out_pad), lambda i: (i, 0))

    kernel = functools.partial(mlp_chain_kernel, kernel_plan)
    out = pl.pallas_call(
        kernel,
        out_shape=jax.ShapeDtypeStruct((B_pad, out_pad), jnp.float32),
        grid_spec=pltpu.PrefetchScalarGridSpec(
            num_scalar_prefetch=0,
            grid=grid,
            in_specs=in_specs,
            out_specs=out_specs,
        ),
        compiler_params=pltpu.CompilerParams(
            dimension_semantics=("parallel",),   # megacore-shard batch on v7x
            vmem_limit_bytes=48 * 1024 * 1024,   # headroom below 64 MiB (v7x)
        ),
    )(observation, z, *kernel_params)
    return out[:batch, :z_dimension]


# ----------------------------------------------------------------------------- #
# Pure-JAX reference (for correctness check)
# ----------------------------------------------------------------------------- #
def reference(observation, z, plan, flat_params):
    h = jnp.concatenate([observation, z], axis=-1).astype(jnp.float32)
    i = 0
    for op in plan:
        if op[0] == "linear":
            w, b = flat_params[i], flat_params[i + 1]
            i += 2
            h = h @ w + b
        elif op[0] == "layernorm":
            g, beta = flat_params[i], flat_params[i + 1]
            i += 2
            mu = jnp.mean(h, axis=-1, keepdims=True)
            var = jnp.mean((h - mu) ** 2, axis=-1, keepdims=True)
            h = (h - mu) * jax.lax.rsqrt(var + 1e-5) * g + beta
        elif op[0] == "tanh":
            h = jnp.tanh(h)
        elif op[0] == "act":
            h = _apply_activation(op[1], h)
    return h


# ----------------------------------------------------------------------------- #
# Main
# ----------------------------------------------------------------------------- #
if __name__ == "__main__":
    # Small config consistent with the module's constructor.
    observation_length = 16
    z_dimension = 8
    preprocessor_hidden_dimension = 32
    preprocessor_feature_space_dimension = 16
    preprocessor_hidden_layers = 2
    number_of_features = 2          # ForwardModel sees number_of_features - 1 = 1
    forward_hidden_dimension = 32
    forward_hidden_layers = 2
    batch = 8

    key = jax.random.PRNGKey(0)
    k_params, k_obs, k_z = jax.random.split(key, 3)

    plan, flat_params, out_dim = build_state_forward_representation(
        k_params,
        observation_length=observation_length,
        preprocessor_hidden_dimension=preprocessor_hidden_dimension,
        preprocessor_feature_space_dimension=preprocessor_feature_space_dimension,
        preprocessor_hidden_layers=preprocessor_hidden_layers,
        preprocessor_activation="relu",
        number_of_features=number_of_features,
        z_dimension=z_dimension,
        forward_hidden_dimension=forward_hidden_dimension,
        forward_hidden_layers=forward_hidden_layers,
        forward_activation="relu",
    )

    observation = jax.random.normal(k_obs, (batch, observation_length), jnp.float32)
    z = jax.random.normal(k_z, (batch, z_dimension), jnp.float32)

    K = state_forward_representation(observation, z, plan, flat_params, out_dim)
    K = jax.block_until_ready(K)

    K_ref = reference(observation, z, plan, flat_params)
    assert K.shape == (batch, z_dimension), K.shape
    assert jnp.allclose(K, K_ref, atol=1e-4, rtol=1e-4), "mismatch vs reference"

    print("KERNEL_OK")
</pallas_src>

<mosaic_0001>
module attributes {stable_mosaic.version = 11 : i64} {
  func.func @mlp_chain_kernel(%arg0: i32, %arg1: memref<8x16xf32, #tpu.memory_space<vmem>>, %arg2: memref<8x8xf32, #tpu.memory_space<vmem>>, %arg3: memref<16x32xf32, #tpu.memory_space<vmem>>, %arg4: memref<8x32xf32, #tpu.memory_space<vmem>>, %arg5: memref<1x32xf32, #tpu.memory_space<vmem>>, %arg6: memref<1x32xf32, #tpu.memory_space<vmem>>, %arg7: memref<1x32xf32, #tpu.memory_space<vmem>>, %arg8: memref<32x32xf32, #tpu.memory_space<vmem>>, %arg9: memref<1x32xf32, #tpu.memory_space<vmem>>, %arg10: memref<32x16xf32, #tpu.memory_space<vmem>>, %arg11: memref<1x16xf32, #tpu.memory_space<vmem>>, %arg12: memref<16x32xf32, #tpu.memory_space<vmem>>, %arg13: memref<1x32xf32, #tpu.memory_space<vmem>>, %arg14: memref<32x32xf32, #tpu.memory_space<vmem>>, %arg15: memref<1x32xf32, #tpu.memory_space<vmem>>, %arg16: memref<32x128xf32, #tpu.memory_space<vmem>>, %arg17: memref<1x128xf32, #tpu.memory_space<vmem>>, %arg18: memref<8x128xf32, #tpu.memory_space<vmem>>) attributes {dimension_semantics = [#tpu.dimension_semantics<parallel>], iteration_bounds = array<i64: 1>, scalar_prefetch = 0 : i64, scratch_operands = 0 : i64, tpu.core_type = #tpu.core_type<tc>, window_params = [{transform_indices = @transform_0, window_bounds = array<i64: 8, 16>}, {transform_indices = @transform_1, window_bounds = array<i64: 8, 8>}, {pipeline_mode = #tpu.pipeline_mode<synchronous>, transform_indices = @transform_2, window_bounds = array<i64: 16, 32>}, {pipeline_mode = #tpu.pipeline_mode<synchronous>, transform_indices = @transform_3, window_bounds = array<i64: 8, 32>}, {pipeline_mode = #tpu.pipeline_mode<synchronous>, transform_indices = @transform_4, window_bounds = array<i64: 1, 32>}, {pipeline_mode = #tpu.pipeline_mode<synchronous>, transform_indices = @transform_5, window_bounds = array<i64: 1, 32>}, {pipeline_mode = #tpu.pipeline_mode<synchronous>, transform_indices = @transform_6, window_bounds = array<i64: 1, 32>}, {pipeline_mode = #tpu.pipeline_mode<synchronous>, transform_indices = @transform_7, window_bounds = array<i64: 32, 32>}, {pipeline_mode = #tpu.pipeline_mode<synchronous>, transform_indices = @transform_8, window_bounds = array<i64: 1, 32>}, {pipeline_mode = #tpu.pipeline_mode<synchronous>, transform_indices = @transform_9, window_bounds = array<i64: 32, 16>}, {pipeline_mode = #tpu.pipeline_mode<synchronous>, transform_indices = @transform_10, window_bounds = array<i64: 1, 16>}, {pipeline_mode = #tpu.pipeline_mode<synchronous>, transform_indices = @transform_11, window_bounds = array<i64: 16, 32>}, {pipeline_mode = #tpu.pipeline_mode<synchronous>, transform_indices = @transform_12, window_bounds = array<i64: 1, 32>}, {pipeline_mode = #tpu.pipeline_mode<synchronous>, transform_indices = @transform_13, window_bounds = array<i64: 32, 32>}, {pipeline_mode = #tpu.pipeline_mode<synchronous>, transform_indices = @transform_14, window_bounds = array<i64: 1, 32>}, {pipeline_mode = #tpu.pipeline_mode<synchronous>, transform_indices = @transform_15, window_bounds = array<i64: 32, 128>}, {pipeline_mode = #tpu.pipeline_mode<synchronous>, transform_indices = @transform_16, window_bounds = array<i64: 1, 128>}, {transform_indices = @transform_17, window_bounds = array<i64: 8, 128>}]} {
    %c0 = arith.constant 0 : index
    %c0_0 = arith.constant 0 : index
    %0 = vector.load %arg3[%c0, %c0_0] : memref<16x32xf32, #tpu.memory_space<vmem>>, vector<16x32xf32>
    %c0_1 = arith.constant 0 : index
    %c0_2 = arith.constant 0 : index
    %1 = vector.load %arg4[%c0_1, %c0_2] : memref<8x32xf32, #tpu.memory_space<vmem>>, vector<8x32xf32>
    %c0_3 = arith.constant 0 : index
    %c0_4 = arith.constant 0 : index
    %2 = vector.load %arg5[%c0_3, %c0_4] : memref<1x32xf32, #tpu.memory_space<vmem>>, vector<1x32xf32>
    %c0_5 = arith.constant 0 : index
    %c0_6 = arith.constant 0 : index
    %3 = vector.load %arg1[%c0_5, %c0_6] : memref<8x16xf32, #tpu.memory_space<vmem>>, vector<8x16xf32>
    %cst = arith.constant dense<0.000000e+00> : vector<8x32xf32>
    %4 = tpu.matmul %3, %0, %cst {dimension_numbers = #tpu.dot_dimension_numbers<[1], [0], [0], [1], [0, 0, 1, 1], [], []>} : vector<8x16xf32>, vector<16x32xf32>, vector<8x32xf32> -> vector<8x32xf32>
    %c0_7 = arith.constant 0 : index
    %c0_8 = arith.constant 0 : index
    %5 = vector.load %arg2[%c0_7, %c0_8] : memref<8x8xf32, #tpu.memory_space<vmem>>, vector<8x8xf32>
    %cst_9 = arith.constant dense<0.000000e+00> : vector<8x32xf32>
    %6 = tpu.matmul %5, %1, %cst_9 {dimension_numbers = #tpu.dot_dimension_numbers<[1], [0], [0], [1], [0, 0, 1, 1], [], []>} : vector<8x8xf32>, vector<8x32xf32>, vector<8x32xf32> -> vector<8x32xf32>
    %7 = arith.addf %4, %6 : vector<8x32xf32>
    %8 = vector.broadcast %2 : vector<1x32xf32> to vector<8x32xf32>
    %9 = arith.addf %7, %8 : vector<8x32xf32>
    %c0_10 = arith.constant 0 : index
    %c0_11 = arith.constant 0 : index
    %10 = vector.load %arg6[%c0_10, %c0_11] : memref<1x32xf32, #tpu.memory_space<vmem>>, vector<1x32xf32>
    %c0_12 = arith.constant 0 : index
    %c0_13 = arith.constant 0 : index
    %11 = vector.load %arg7[%c0_12, %c0_13] : memref<1x32xf32, #tpu.memory_space<vmem>>, vector<1x32xf32>
    %cst_14 = arith.constant dense<0.000000e+00> : vector<8xf32>
    %12 = vector.multi_reduction <add>, %9, %cst_14 [1] : vector<8x32xf32> to vector<8xf32>
    %13 = vector.shape_cast %12 : vector<8xf32> to vector<8x1xf32>
    %cst_15 = arith.constant 3.125000e-02 : f32
    %14 = vector.broadcast %cst_15 : f32 to vector<8x1xf32>
    %15 = arith.mulf %13, %14 : vector<8x1xf32>
    %16 = arith.mulf %9, %9 : vector<8x32xf32>
    %cst_16 = arith.constant dense<0.000000e+00> : vector<8xf32>
    %17 = vector.multi_reduction <add>, %16, %cst_16 [1] : vector<8x32xf32> to vector<8xf32>
    %18 = vector.shape_cast %17 : vector<8xf32> to vector<8x1xf32>
    %cst_17 = arith.constant 3.125000e-02 : f32
    %19 = vector.broadcast %cst_17 : f32 to vector<8x1xf32>
    %20 = arith.mulf %18, %19 : vector<8x1xf32>
    %21 = arith.mulf %15, %15 : vector<8x1xf32>
    %22 = arith.subf %20, %21 : vector<8x1xf32>
    %cst_18 = arith.constant 0.000000e+00 : f32
    %23 = vector.broadcast %cst_18 : f32 to vector<8x1xf32>
    %24 = arith.maximumf %22, %23 : vector<8x1xf32>
    %25 = vector.broadcast %15 : vector<8x1xf32> to vector<8x32xf32>
    %26 = arith.subf %9, %25 : vector<8x32xf32>
    %cst_19 = arith.constant 9.99999974E-6 : f32
    %27 = vector.broadcast %cst_19 : f32 to vector<8x1xf32>
    %28 = arith.addf %24, %27 : vector<8x1xf32>
    %29 = math.rsqrt %28 : vector<8x1xf32>
    %30 = vector.broadcast %29 : vector<8x1xf32> to vector<8x32xf32>
    %31 = vector.broadcast %10 : vector<1x32xf32> to vector<8x32xf32>
    %32 = arith.mulf %30, %31 : vector<8x32xf32>
    %33 = arith.mulf %26, %32 : vector<8x32xf32>
    %34 = vector.broadcast %11 : vector<1x32xf32> to vector<8x32xf32>
    %35 = arith.addf %33, %34 : vector<8x32xf32>
    %36 = math.tanh %35 : vector<8x32xf32>
    %c0_20 = arith.constant 0 : index
    %c0_21 = arith.constant 0 : index
    %37 = vector.load %arg8[%c0_20, %c0_21] : memref<32x32xf32, #tpu.memory_space<vmem>>, vector<32x32xf32>
    %c0_22 = arith.constant 0 : index
    %c0_23 = arith.constant 0 : index
    %38 = vector.load %arg9[%c0_22, %c0_23] : memref<1x32xf32, #tpu.memory_space<vmem>>, vector<1x32xf32>
    %cst_24 = arith.constant dense<0.000000e+00> : vector<8x32xf32>
    %39 = tpu.matmul %36, %37, %cst_24 {dimension_numbers = #tpu.dot_dimension_numbers<[1], [0], [0], [1], [0, 0, 1, 1], [], []>} : vector<8x32xf32>, vector<32x32xf32>, vector<8x32xf32> -> vector<8x32xf32>
    %40 = vector.broadcast %38 : vector<1x32xf32> to vector<8x32xf32>
    %41 = arith.addf %39, %40 : vector<8x32xf32>
    %cst_25 = arith.constant 0.000000e+00 : f32
    %42 = vector.broadcast %cst_25 : f32 to vector<8x32xf32>
    %43 = arith.maximumf %41, %42 : vector<8x32xf32>
    %c0_26 = arith.constant 0 : index
    %c0_27 = arith.constant 0 : index
    %44 = vector.load %arg10[%c0_26, %c0_27] : memref<32x16xf32, #tpu.memory_space<vmem>>, vector<32x16xf32>
    %c0_28 = arith.constant 0 : index
    %c0_29 = arith.constant 0 : index
    %45 = vector.load %arg11[%c0_28, %c0_29] : memref<1x16xf32, #tpu.memory_space<vmem>>, vector<1x16xf32>
    %cst_30 = arith.constant dense<0.000000e+00> : vector<8x16xf32>
    %46 = tpu.matmul %43, %44, %cst_30 {dimension_numbers = #tpu.dot_dimension_numbers<[1], [0], [0], [1], [0, 0, 1, 1], [], []>} : vector<8x32xf32>, vector<32x16xf32>, vector<8x16xf32> -> vector<8x16xf32>
    %47 = vector.broadcast %45 : vector<1x16xf32> to vector<8x16xf32>
    %48 = arith.addf %46, %47 : vector<8x16xf32>
    %c0_31 = arith.constant 0 : index
    %c0_32 = arith.constant 0 : index
    %49 = vector.load %arg12[%c0_31, %c0_32] : memref<16x32xf32, #tpu.memory_space<vmem>>, vector<16x32xf32>
    %c0_33 = arith.constant 0 : index
    %c0_34 = arith.constant 0 : index
    %50 = vector.load %arg13[%c0_33, %c0_34] : memref<1x32xf32, #tpu.memory_space<vmem>>, vector<1x32xf32>
    %cst_35 = arith.constant dense<0.000000e+00> : vector<8x32xf32>
    %51 = tpu.matmul %48, %49, %cst_35 {dimension_numbers = #tpu.dot_dimension_numbers<[1], [0], [0], [1], [0, 0, 1, 1], [], []>} : vector<8x16xf32>, vector<16x32xf32>, vector<8x32xf32> -> vector<8x32xf32>
    %52 = vector.broadcast %50 : vector<1x32xf32> to vector<8x32xf32>
    %53 = arith.addf %51, %52 : vector<8x32xf32>
    %cst_36 = arith.constant 0.000000e+00 : f32
    %54 = vector.broadcast %cst_36 : f32 to vector<8x32xf32>
    %55 = arith.maximumf %53, %54 : vector<8x32xf32>
    %c0_37 = arith.constant 0 : index
    %c0_38 = arith.constant 0 : index
    %56 = vector.load %arg14[%c0_37, %c0_38] : memref<32x32xf32, #tpu.memory_space<vmem>>, vector<32x32xf32>
    %c0_39 = arith.constant 0 : index
    %c0_40 = arith.constant 0 : index
    %57 = vector.load %arg15[%c0_39, %c0_40] : memref<1x32xf32, #tpu.memory_space<vmem>>, vector<1x32xf32>
    %cst_41 = arith.constant dense<0.000000e+00> : vector<8x32xf32>
    %58 = tpu.matmul %55, %56, %cst_41 {dimension_numbers = #tpu.dot_dimension_numbers<[1], [0], [0], [1], [0, 0, 1, 1], [], []>} : vector<8x32xf32>, vector<32x32xf32>, vector<8x32xf32> -> vector<8x32xf32>
    %59 = vector.broadcast %57 : vector<1x32xf32> to vector<8x32xf32>
    %60 = arith.addf %58, %59 : vector<8x32xf32>
    %cst_42 = arith.constant 0.000000e+00 : f32
    %61 = vector.broadcast %cst_42 : f32 to vector<8x32xf32>
    %62 = arith.maximumf %60, %61 : vector<8x32xf32>
    %c0_43 = arith.constant 0 : index
    %c0_44 = arith.constant 0 : index
    %63 = vector.load %arg16[%c0_43, %c0_44] : memref<32x128xf32, #tpu.memory_space<vmem>>, vector<32x128xf32>
    %c0_45 = arith.constant 0 : index
    %c0_46 = arith.constant 0 : index
    %64 = vector.load %arg17[%c0_45, %c0_46] : memref<1x128xf32, #tpu.memory_space<vmem>>, vector<1x128xf32>
    %cst_47 = arith.constant dense<0.000000e+00> : vector<8x128xf32>
    %65 = tpu.matmul %62, %63, %cst_47 {dimension_numbers = #tpu.dot_dimension_numbers<[1], [0], [0], [1], [0, 0, 1, 1], [], []>} : vector<8x32xf32>, vector<32x128xf32>, vector<8x128xf32> -> vector<8x128xf32>
    %66 = vector.broadcast %64 : vector<1x128xf32> to vector<8x128xf32>
    %67 = arith.addf %65, %66 : vector<8x128xf32>
    %c0_48 = arith.constant 0 : index
    %c0_49 = arith.constant 0 : index
    %68 = vector.load %arg18[%c0_48, %c0_49] : memref<8x128xf32, #tpu.memory_space<vmem>>, vector<8x128xf32>
    tpu.vector_store %arg18[%c0_48, %c0_49], %67 {strides = array<i32>} : memref<8x128xf32, #tpu.memory_space<vmem>>, vector<8x128xf32>,
    return
  }
  func.func @transform_0(%arg0: i32) -> (i32, i32) {
    %c0_i32 = arith.constant 0 : i32
    %c0_i32_0 = arith.constant 0 : i32
    return %arg0, %c0_i32 : i32, i32
  }
  func.func @transform_1(%arg0: i32) -> (i32, i32) {
    %c0_i32 = arith.constant 0 : i32
    %c0_i32_0 = arith.constant 0 : i32
    return %arg0, %c0_i32 : i32, i32
  }
  func.func @transform_2(%arg0: i32) -> (i32, i32) {
    %c0_i32 = arith.constant 0 : i32
    %c0_i32_0 = arith.constant 0 : i32
    %c0_i32_1 = arith.constant 0 : i32
    return %c0_i32, %c0_i32_0 : i32, i32
  }
  func.func @transform_3(%arg0: i32) -> (i32, i32) {
    %c0_i32 = arith.constant 0 : i32
    %c0_i32_0 = arith.constant 0 : i32
    %c0_i32_1 = arith.constant 0 : i32
    return %c0_i32, %c0_i32_0 : i32, i32
  }
  func.func @transform_4(%arg0: i32) -> (i32, i32) {
    %c0_i32 = arith.constant 0 : i32
    %c0_i32_0 = arith.constant 0 : i32
    %c0_i32_1 = arith.constant 0 : i32
    return %c0_i32, %c0_i32_0 : i32, i32
  }
  func.func @transform_5(%arg0: i32) -> (i32, i32) {
    %c0_i32 = arith.constant 0 : i32
    %c0_i32_0 = arith.constant 0 : i32
    %c0_i32_1 = arith.constant 0 : i32
    return %c0_i32, %c0_i32_0 : i32, i32
  }
  func.func @transform_6(%arg0: i32) -> (i32, i32) {
    %c0_i32 = arith.constant 0 : i32
    %c0_i32_0 = arith.constant 0 : i32
    %c0_i32_1 = arith.constant 0 : i32
    return %c0_i32, %c0_i32_0 : i32, i32
  }
  func.func @transform_7(%arg0: i32) -> (i32, i32) {
    %c0_i32 = arith.constant 0 : i32
    %c0_i32_0 = arith.constant 0 : i32
    %c0_i32_1 = arith.constant 0 : i32
    return %c0_i32, %c0_i32_0 : i32, i32
  }
  func.func @transform_8(%arg0: i32) -> (i32, i32) {
    %c0_i32 = arith.constant 0 : i32
    %c0_i32_0 = arith.constant 0 : i32
    %c0_i32_1 = arith.constant 0 : i32
    return %c0_i32, %c0_i32_0 : i32, i32
  }
  func.func @transform_9(%arg0: i32) -> (i32, i32) {
    %c0_i32 = arith.constant 0 : i32
    %c0_i32_0 = arith.constant 0 : i32
    %c0_i32_1 = arith.constant 0 : i32
    return %c0_i32, %c0_i32_0 : i32, i32
  }
  func.func @transform_10(%arg0: i32) -> (i32, i32) {
    %c0_i32 = arith.constant 0 : i32
    %c0_i32_0 = arith.constant 0 : i32
    %c0_i32_1 = arith.constant 0 : i32
    return %c0_i32, %c0_i32_0 : i32, i32
  }
  func.func @transform_11(%arg0: i32) -> (i32, i32) {
    %c0_i32 = arith.constant 0 : i32
    %c0_i32_0 = arith.constant 0 : i32
    %c0_i32_1 = arith.constant 0 : i32
    return %c0_i32, %c0_i32_0 : i32, i32
  }
  func.func @transform_12(%arg0: i32) -> (i32, i32) {
    %c0_i32 = arith.constant 0 : i32
    %c0_i32_0 = arith.constant 0 : i32
    %c0_i32_1 = arith.constant 0 : i32
    return %c0_i32, %c0_i32_0 : i32, i32
  }
  func.func @transform_13(%arg0: i32) -> (i32, i32) {
    %c0_i32 = arith.constant 0 : i32
    %c0_i32_0 = arith.constant 0 : i32
    %c0_i32_1 = arith.constant 0 : i32
    return %c0_i32, %c0_i32_0 : i32, i32
  }
  func.func @transform_14(%arg0: i32) -> (i32, i32) {
    %c0_i32 = arith.constant 0 : i32
    %c0_i32_0 = arith.constant 0 : i32
    %c0_i32_1 = arith.constant 0 : i32
    return %c0_i32, %c0_i32_0 : i32, i32
  }
  func.func @transform_15(%arg0: i32) -> (i32, i32) {
    %c0_i32 = arith.constant 0 : i32
    %c0_i32_0 = arith.constant 0 : i32
    %c0_i32_1 = arith.constant 0 : i32
    return %c0_i32, %c0_i32_0 : i32, i32
  }
  func.func @transform_16(%arg0: i32) -> (i32, i32) {
    %c0_i32 = arith.constant 0 : i32
    %c0_i32_0 = arith.constant 0 : i32
    %c0_i32_1 = arith.constant 0 : i32
    return %c0_i32, %c0_i32_0 : i32, i32
  }
  func.func @transform_17(%arg0: i32) -> (i32, i32) {
    %c0_i32 = arith.constant 0 : i32
    %c0_i32_0 = arith.constant 0 : i32
    return %arg0, %c0_i32 : i32, i32
  }
}

</mosaic_0001>

<llo_original>
// kernel: tpu_custom_call.1
$region0: #{tpu_custom_call.1}
  #allocation0 [shape = 'u32[]', space=smem, size = 0x4, offset = 0x4, fixed_abs, tag = 'smem constant byte address 0x4 - core index']
  #allocation1 [shape = 'u32[144,128]{1,0:T(1,128)}', space=vmem, size = 0x12000, scoped, tag = 'internal scratch']
  %s0 = inlined_call_operand.hbm [shape: f32[8,16], index: 0, kind: input, shape index: {}]
  %s1 = inlined_call_operand.hbm [shape: f32[8,8], index: 1, kind: input, shape index: {}]
  %s2 = inlined_call_operand.hbm [shape: f32[16,32], index: 2, kind: input, shape index: {}]
  %s3 = inlined_call_operand.hbm [shape: f32[8,32], index: 3, kind: input, shape index: {}]
  %s4 = inlined_call_operand.vmem [shape: f32[1,32], index: 4, kind: input, shape index: {}]
  %s5 = inlined_call_operand.hbm [shape: f32[1,32], index: 5, kind: input, shape index: {}]
  %s6 = inlined_call_operand.hbm [shape: f32[1,32], index: 6, kind: input, shape index: {}]
  %s7 = inlined_call_operand.vmem [shape: f32[32,32], index: 7, kind: input, shape index: {}]
  %s8 = inlined_call_operand.hbm [shape: f32[1,32], index: 8, kind: input, shape index: {}]
  %s9 = inlined_call_operand.vmem [shape: f32[32,16], index: 9, kind: input, shape index: {}]
  %s10 = inlined_call_operand.hbm [shape: f32[1,16], index: 10, kind: input, shape index: {}]
  %s11 = inlined_call_operand.hbm [shape: f32[16,32], index: 11, kind: input, shape index: {}]
  %s12 = inlined_call_operand.hbm [shape: f32[1,32], index: 12, kind: input, shape index: {}]
  %s13 = inlined_call_operand.vmem [shape: f32[32,32], index: 13, kind: input, shape index: {}]
  %s14 = inlined_call_operand.vmem [shape: f32[1,32], index: 14, kind: input, shape index: {}]
  %s15 = inlined_call_operand.vmem [shape: f32[32,128], index: 15, kind: input, shape index: {}]
  %s16 = inlined_call_operand.vmem [shape: f32[1,128], index: 16, kind: input, shape index: {}]
  %s17 = inlined_call_operand.hbm [shape: f32[8,128], index: 17, kind: output, shape index: {}]
  %s18 = sld [smem:[#allocation0]]
  $region118: #{tpu_custom_call.1} parent=0
    _
  %s20 = ssub.s32 1, %s18
  %s21 = scalar_select 0, %s20, %s18
  $region1: #{tpu_custom_call.1} parent=0
    #allocation2 [shape = 'u8[4096]{0}', space=vmem, size = 0x1000, scoped, tag = 'input window, operand 0, single buffered']
    #allocation3 [shape = 's32[1]{0}', space=sflag, size = 0x4, scoped, tag = 'scoped memory for tpu_custom_call.1']
    #allocation4 [shape = 's32[1]{0}', space=sflag, size = 0x4, scoped, tag = 'scoped memory for tpu_custom_call.1']
    #allocation5 [shape = 'u8[4096]{0}', space=vmem, size = 0x1000, scoped, tag = 'input window, operand 1, single buffered']
    #allocation6 [shape = 's32[1]{0}', space=sflag, size = 0x4, scoped, tag = 'scoped memory for tpu_custom_call.1']
    #allocation7 [shape = 'u8[8192]{0}', space=vmem, size = 0x2000, scoped, tag = 'input window, operand 2, single buffered']
    #allocation8 [shape = 'u8[4096]{0}', space=vmem, size = 0x1000, scoped, tag = 'input window, operand 3, single buffered']
    #allocation9 [shape = 's32[1]{0}', space=sflag, size = 0x4, scoped, tag = 'scoped memory for tpu_custom_call.1']
    #allocation10 [shape = 'u8[512]{0}', space=vmem, size = 0x400, scoped, tag = 'input window, operand 5, single buffered']
    #allocation11 [shape = 'u8[512]{0}', space=vmem, size = 0x400, scoped, tag = 'input window, operand 6, single buffered']
    #allocation12 [shape = 's32[1]{0}', space=sflag, size = 0x4, scoped, tag = 'scoped memory for tpu_custom_call.1']
    #allocation13 [shape = 'u8[512]{0}', space=vmem, size = 0x400, scoped, tag = 'input window, operand 8, single buffered']
    #allocation14 [shape = 'u8[512]{0}', space=vmem, size = 0x400, scoped, tag = 'input window, operand 10, single buffered']
    #allocation15 [shape = 's32[1]{0}', space=sflag, size = 0x4, scoped, tag = 'scoped memory for tpu_custom_call.1']
    #allocation16 [shape = 'u8[8192]{0}', space=vmem, size = 0x2000, scoped, tag = 'input window, operand 11, single buffered']
    #allocation17 [shape = 'u8[512]{0}', space=vmem, size = 0x400, scoped, tag = 'input window, operand 12, single buffered']
    #allocation18 [shape = 's32[1]{0}', space=sflag, size = 0x4, scoped, tag = 'scoped memory for tpu_custom_call.1']
    #allocation19 [shape = 'u8[4096]{0}', space=vmem, size = 0x1000, scoped, tag = 'output window, operand 0, single buffered']
    %22 = vsyncpa [#allocation3], 0
    %23 = vsyncpa [#allocation6], 0
    %24 = vsyncpa [#allocation9], 0
    %25 = vsyncpa [#allocation12], 0
    %26 = vsyncpa [#allocation15], 0
    %27 = vsyncpa [#allocation18], 0
    %28 = vsyncpa [#allocation4], 0
    // Predicated region
    $region2: #{tpu_custom_call.1} parent=1 // pred_check
      _
    $region3: #{tpu_custom_call.1} parent=1 // pred_check_branch
      %30 = sbr.rel (0) target = $region5
    $region4: #{tpu_custom_call.1} parent=1 // pred_region
      %s32 = ssub.s32 128, 128
      %33 = vsyncadd [#allocation3], %s32
      %s35 = sshll.u32 [#allocation2], 4
      %s36 = int_to_ptr.vmem [resolvable:$true] %s35
      %38 = dma.hbm_to_vmem [thread:$0]  %s0, 128, %s36, [#allocation3]
    $region5: #{tpu_custom_call.1} parent=1 // pred_fallthru
      _
    // Predicated region
    $region6: #{tpu_custom_call.1} parent=1 // pred_check
      _
    $region7: #{tpu_custom_call.1} parent=1 // pred_check_branch
      %40 = sbr.rel (0) target = $region9
    $region8: #{tpu_custom_call.1} parent=1 // pred_region
      %s42 = ssub.s32 128, 128
      %43 = vsyncadd [#allocation6], %s42
      %s45 = sshll.u32 [#allocation5], 4
      %s46 = int_to_ptr.vmem [resolvable:$true] %s45
      %48 = dma.hbm_to_vmem [thread:$0]  %s1, 128, %s46, [#allocation6]
    $region9: #{tpu_custom_call.1} parent=1 // pred_fallthru
      _
    // Predicated region
    $region10: #{tpu_custom_call.1} parent=1 // pred_check
      _
    $region11: #{tpu_custom_call.1} parent=1 // pred_check_branch
      %50 = sbr.rel (0) target = $region13
    $region12: #{tpu_custom_call.1} parent=1 // pred_region
      %s52 = ssub.s32 256, 256
      %53 = vsyncadd [#allocation6], %s52
      %s54 = sshll.u32 [#allocation7], 4
      %s55 = int_to_ptr.vmem [resolvable:$true] %s54
      %60 = dma.hbm_to_vmem [thread:$0]  %s2, 256, %s55, [#allocation6], 128, 128, 8
    $region13: #{tpu_custom_call.1} parent=1 // pred_fallthru
      _
    // Predicated region
    $region14: #{tpu_custom_call.1} parent=1 // pred_check
      _
    $region15: #{tpu_custom_call.1} parent=1 // pred_check_branch
      %62 = sbr.rel (0) target = $region17
    $region16: #{tpu_custom_call.1} parent=1 // pred_region
      %s64 = ssub.s32 128, 128
      %65 = vsyncadd [#allocation9], %s64
      %s67 = sshll.u32 [#allocation8], 4
      %s68 = int_to_ptr.vmem [resolvable:$true] %s67
      %70 = dma.hbm_to_vmem [thread:$0]  %s3, 128, %s68, [#allocation9]
    $region17: #{tpu_custom_call.1} parent=1 // pred_fallthru
      _
    // Predicated region
    $region18: #{tpu_custom_call.1} parent=1 // pred_check
      _
    $region19: #{tpu_custom_call.1} parent=1 // pred_check_branch
      %72 = sbr.rel (0) target = $region21
    $region20: #{tpu_custom_call.1} parent=1 // pred_region
      _
    $region21: #{tpu_custom_call.1} parent=1 // pred_fallthru
      _
    // Predicated region
    $region22: #{tpu_custom_call.1} parent=1 // pred_check
      _
    $region23: #{tpu_custom_call.1} parent=1 // pred_check_branch
      %74 = sbr.rel (0) target = $region25
    $region24: #{tpu_custom_call.1} parent=1 // pred_region
      %s76 = ssub.s32 16, 16
      %77 = vsyncadd [#allocation9], %s76
      %s79 = sshll.u32 [#allocation10], 4
      %s80 = int_to_ptr.vmem [resolvable:$true] %s79
      %82 = dma.hbm_to_vmem [thread:$0]  %s5, 16, %s80, [#allocation9]
    $region25: #{tpu_custom_call.1} parent=1 // pred_fallthru
      _
    // Predicated region
    $region26: #{tpu_custom_call.1} parent=1 // pred_check
      _
    $region27: #{tpu_custom_call.1} parent=1 // pred_check_branch
      %84 = sbr.rel (0) target = $region29
    $region28: #{tpu_custom_call.1} parent=1 // pred_region
      %s86 = ssub.s32 16, 16
      %87 = vsyncadd [#allocation12], %s86
      %s89 = sshll.u32 [#allocation11], 4
      %s90 = int_to_ptr.vmem [resolvable:$true] %s89
      %92 = dma.hbm_to_vmem [thread:$0]  %s6, 16, %s90, [#allocation12]
    $region29: #{tpu_custom_call.1} parent=1 // pred_fallthru
      _
    // Predicated region
    $region30: #{tpu_custom_call.1} parent=1 // pred_check
      _
    $region31: #{tpu_custom_call.1} parent=1 // pred_check_branch
      %94 = sbr.rel (0) target = $region33
    $region32: #{tpu_custom_call.1} parent=1 // pred_region
      _
    $region33: #{tpu_custom_call.1} parent=1 // pred_fallthru
      _
    // Predicated region
    $region34: #{tpu_custom_call.1} parent=1 // pred_check
      _
    $region35: #{tpu_custom_call.1} parent=1 // pred_check_branch
      %96 = sbr.rel (0) target = $region37
    $region36: #{tpu_custom_call.1} parent=1 // pred_region
      %s98 = ssub.s32 16, 16
      %99 = vsyncadd [#allocation12], %s98
      %s101 = sshll.u32 [#allocation13], 4
      %s102 = int_to_ptr.vmem [resolvable:$true] %s101
      %104 = dma.hbm_to_vmem [thread:$0]  %s8, 16, %s102, [#allocation12]
    $region37: #{tpu_custom_call.1} parent=1 // pred_fallthru
      _
    // Predicated region
    $region38: #{tpu_custom_call.1} parent=1 // pred_check
      _
    $region39: #{tpu_custom_call.1} parent=1 // pred_check_branch
      %106 = sbr.rel (0) target = $region41
    $region40: #{tpu_custom_call.1} parent=1 // pred_region
      _
    $region41: #{tpu_custom_call.1} parent=1 // pred_fallthru
      _
    // Predicated region
    $region42: #{tpu_custom_call.1} parent=1 // pred_check
      _
    $region43: #{tpu_custom_call.1} parent=1 // pred_check_branch
      %108 = sbr.rel (0) target = $region45
    $region44: #{tpu_custom_call.1} parent=1 // pred_region
      %s110 = ssub.s32 16, 16
      %111 = vsyncadd [#allocation15], %s110
      %s113 = sshll.u32 [#allocation14], 4
      %s114 = int_to_ptr.vmem [resolvable:$true] %s113
      %116 = dma.hbm_to_vmem [thread:$0]  %s10, 16, %s114, [#allocation15]
    $region45: #{tpu_custom_call.1} parent=1 // pred_fallthru
      _
    // Predicated region
    $region46: #{tpu_custom_call.1} parent=1 // pred_check
      _
    $region47: #{tpu_custom_call.1} parent=1 // pred_check_branch
      %118 = sbr.rel (0) target = $region49
    $region48: #{tpu_custom_call.1} parent=1 // pred_region
      %s120 = ssub.s32 256, 256
      %121 = vsyncadd [#allocation15], %s120
      %s122 = sshll.u32 [#allocation16], 4
      %s123 = int_to_ptr.vmem [resolvable:$true] %s122
      %128 = dma.hbm_to_vmem [thread:$0]  %s11, 256, %s123, [#allocation15], 128, 128, 8
    $region49: #{tpu_custom_call.1} parent=1 // pred_fallthru
      _
    // Predicated region
    $region50: #{tpu_custom_call.1} parent=1 // pred_check
      _
    $region51: #{tpu_custom_call.1} parent=1 // pred_check_branch
      %130 = sbr.rel (0) target = $region53
    $region52: #{tpu_custom_call.1} parent=1 // pred_region
      %s132 = ssub.s32 16, 16
      %133 = vsyncadd [#allocation18], %s132
      %s135 = sshll.u32 [#allocation17], 4
      %s136 = int_to_ptr.vmem [resolvable:$true] %s135
      %138 = dma.hbm_to_vmem [thread:$0]  %s12, 16, %s136, [#allocation18]
    $region53: #{tpu_custom_call.1} parent=1 // pred_fallthru
      _
    // Predicated region
    $region54: #{tpu_custom_call.1} parent=1 // pred_check
      _
    $region55: #{tpu_custom_call.1} parent=1 // pred_check_branch
      %140 = sbr.rel (0) target = $region57
    $region56: #{tpu_custom_call.1} parent=1 // pred_region
      _
    $region57: #{tpu_custom_call.1} parent=1 // pred_fallthru
      _
    // Predicated region
    $region58: #{tpu_custom_call.1} parent=1 // pred_check
      _
    $region59: #{tpu_custom_call.1} parent=1 // pred_check_branch
      %142 = sbr.rel (0) target = $region61
    $region60: #{tpu_custom_call.1} parent=1 // pred_region
      _
    $region61: #{tpu_custom_call.1} parent=1 // pred_fallthru
      _
    // Predicated region
    $region62: #{tpu_custom_call.1} parent=1 // pred_check
      _
    $region63: #{tpu_custom_call.1} parent=1 // pred_check_branch
      %144 = sbr.rel (0) target = $region65
    $region64: #{tpu_custom_call.1} parent=1 // pred_region
      _
    $region65: #{tpu_custom_call.1} parent=1 // pred_fallthru
      _
    // Predicated region
    $region66: #{tpu_custom_call.1} parent=1 // pred_check
      _
    $region67: #{tpu_custom_call.1} parent=1 // pred_check_branch
      %146 = sbr.rel (0) target = $region69
    $region68: #{tpu_custom_call.1} parent=1 // pred_region
      _
    $region69: #{tpu_custom_call.1} parent=1 // pred_fallthru
      _
    // Predicated region
    $region70: #{tpu_custom_call.1} parent=1 // pred_check
      _
    $region71: #{tpu_custom_call.1} parent=1 // pred_check_branch
      %148 = sbr.rel (0) target = $region73
    $region72: #{tpu_custom_call.1} parent=1 // pred_region
      %149 = dma.done [#allocation3], 128
    $region73: #{tpu_custom_call.1} parent=1 // pred_fallthru
      _
    // Predicated region
    $region74: #{tpu_custom_call.1} parent=1 // pred_check
      _
    $region75: #{tpu_custom_call.1} parent=1 // pred_check_branch
      %151 = sbr.rel (0) target = $region77
    $region76: #{tpu_custom_call.1} parent=1 // pred_region
      %152 = dma.done [#allocation6], 128
    $region77: #{tpu_custom_call.1} parent=1 // pred_fallthru
      _
    // Predicated region
    $region78: #{tpu_custom_call.1} parent=1 // pred_check
      _
    $region79: #{tpu_custom_call.1} parent=1 // pred_check_branch
      %154 = sbr.rel (0) target = $region81
    $region80: #{tpu_custom_call.1} parent=1 // pred_region
      %155 = dma.done [#allocation6], 256
    $region81: #{tpu_custom_call.1} parent=1 // pred_fallthru
      _
    // Predicated region
    $region82: #{tpu_custom_call.1} parent=1 // pred_check
      _
    $region83: #{tpu_custom_call.1} parent=1 // pred_check_branch
      %157 = sbr.rel (0) target = $region85
    $region84: #{tpu_custom_call.1} parent=1 // pred_region
      %158 = dma.done [#allocation9], 128
    $region85: #{tpu_custom_call.1} parent=1 // pred_fallthru
      _
    // Predicated region
    $region86: #{tpu_custom_call.1} parent=1 // pred_check
      _
    $region87: #{tpu_custom_call.1} parent=1 // pred_check_branch
      %160 = sbr.rel (0) target = $region89
    $region88: #{tpu_custom_call.1} parent=1 // pred_region
      %161 = dma.done [#allocation9], 16
    $region89: #{tpu_custom_call.1} parent=1 // pred_fallthru
      _
    // Predicated region
    $region90: #{tpu_custom_call.1} parent=1 // pred_check
      _
    $region91: #{tpu_custom_call.1} parent=1 // pred_check_branch
      %163 = sbr.rel (0) target = $region93
    $region92: #{tpu_custom_call.1} parent=1 // pred_region
      %164 = dma.done [#allocation12], 16
    $region93: #{tpu_custom_call.1} parent=1 // pred_fallthru
      _
    // Predicated region
    $region94: #{tpu_custom_call.1} parent=1 // pred_check
      _
    $region95: #{tpu_custom_call.1} parent=1 // pred_check_branch
      %166 = sbr.rel (0) target = $region97
    $region96: #{tpu_custom_call.1} parent=1 // pred_region
      %167 = dma.done [#allocation12], 16
    $region97: #{tpu_custom_call.1} parent=1 // pred_fallthru
      _
    // Predicated region
    $region98: #{tpu_custom_call.1} parent=1 // pred_check
      _
    $region99: #{tpu_custom_call.1} parent=1 // pred_check_branch
      %169 = sbr.rel (0) target = $region101
    $region100: #{tpu_custom_call.1} parent=1 // pred_region
      %170 = dma.done [#allocation15], 16
    $region101: #{tpu_custom_call.1} parent=1 // pred_fallthru
      _
    // Predicated region
    $region102: #{tpu_custom_call.1} parent=1 // pred_check
      _
    $region103: #{tpu_custom_call.1} parent=1 // pred_check_branch
      %172 = sbr.rel (0) target = $region105
    $region104: #{tpu_custom_call.1} parent=1 // pred_region
      %173 = dma.done [#allocation15], 256
    $region105: #{tpu_custom_call.1} parent=1 // pred_fallthru
      _
    // Predicated region
    $region106: #{tpu_custom_call.1} parent=1 // pred_check
      _
    $region107: #{tpu_custom_call.1} parent=1 // pred_check_branch
      %175 = sbr.rel (0) target = $region109
    $region108: #{tpu_custom_call.1} parent=1 // pred_region
      %176 = dma.done [#allocation18], 16
    $region109: #{tpu_custom_call.1} parent=1 // pred_fallthru
      _
    %v177 = vld [vmem:[#allocation7] sm:$0xff]
    %v178 = vld [vmem:[#allocation7 + $0x8] sm:$0xff]
    %v179 = vld [vmem:[#allocation8] sm:$0xff]
    %v180 = vld [vmem:[%s4] sm:$0x1]
    %v181 = vld [vmem:[#allocation2] sm:$0xff]
    %v182 = vld [vmem:[#allocation5] sm:$0xff]
    %vm183 = vcmask 64512
    %v185 = vsel %vm183, %v182, 0
    %187 = vmatprep.subr.mxu0 0.0
    %188 = vmatpush1.msra.mxu0 %v179
    %189 = vmatprep.subr.mxu0 0.0
    %190 = vmatpush1.msra.mxu0 0.0
    %191 = vmatprep.subr.mxu0 0.0
    %192 = vmatpush1.msra.mxu0 0.0
    %193 = vmatprep.subr.mxu0 0.0
    %194 = vmatpush1.msra.mxu0 0.0
    %195 = vmatprep.subr.mxu0 0.0
    %196 = vmatpush1.msra.mxu0 0.0
    %197 = vmatprep.subr.mxu0 0.0
    %198 = vmatpush1.msra.mxu0 0.0
    %199 = vmatprep.subr.mxu0 0.0
    %200 = vmatpush1.msra.mxu0 0.0
    %201 = vmatprep.subr.mxu0 0.0
    %202 = vmatpush1.msra.mxu0 0.0
    %203 = vmatprep.subr.mxu0 0.0
    %204 = vmatpush1.msra.mxu0 0.0
    %205 = vmatprep.subr.mxu0 0.0
    %206 = vmatpush1.msra.mxu0 0.0
    %207 = vmatprep.subr.mxu0 0.0
    %208 = vmatpush1.msra.mxu0 0.0
    %209 = vmatprep.subr.mxu0 0.0
    %210 = vmatpush1.msra.mxu0 0.0
    %211 = vmatprep.subr.mxu0 0.0
    %212 = vmatpush1.msra.mxu0 0.0
    %213 = vmatprep.subr.mxu0 0.0
    %214 = vmatpush1.msra.mxu0 0.0
    %215 = vmatprep.subr.mxu0 0.0
    %216 = vmatpush1.msra.mxu0 0.0
    %217 = vmatprep.subr.mxu0 0.0
    %218 = vmatpush1.msra.mxu0 0.0
    %219 = vmatprep.subr.mxu0 0.0
    %220 = vmatpush1.msra.mxu0 0.0
    %221 = vmatprep.subr.mxu0 0.0
    %222 = vmatpush1.msra.mxu0 0.0
    %223 = vmatprep.subr.mxu0 0.0
    %224 = vmatpush1.msra.mxu0 0.0
    %225 = vmatprep.subr.mxu0 0.0
    %226 = vmatpush1.msra.mxu0 0.0
    %227 = vmatprep.subr.mxu0 0.0
    %228 = vmatpush1.msra.mxu0 0.0
    %229 = vmatprep.subr.mxu0 0.0
    %230 = vmatpush1.msra.mxu0 0.0
    %231 = vmatprep.subr.mxu0 0.0
    %232 = vmatpush1.msra.mxu0 0.0
    %233 = vmatprep.subr.mxu0 0.0
    %234 = vmatpush1.msra.mxu0 0.0
    %235 = vmatprep.subr.mxu0 0.0
    %236 = vmatpush1.msra.mxu0 0.0
    %237 = vmatprep.subr.mxu0 0.0
    %238 = vmatpush1.msra.mxu0 0.0
    %239 = vmatprep.subr.mxu0 0.0
    %240 = vmatpush1.msra.mxu0 0.0
    %241 = vmatprep.subr.mxu0 0.0
    %242 = vmatpush1.msra.mxu0 0.0
    %243 = vmatprep.subr.mxu0 0.0
    %244 = vmatpush1.msra.mxu0 0.0
    %245 = vmatprep.subr.mxu0 0.0
    %246 = vmatpush1.msra.mxu0 0.0
    %247 = vmatprep.subr.mxu0 0.0
    %248 = vmatpush1.msra.mxu0 0.0
    %249 = vmatprep.subr.mxu0 0.0
    %250 = vmatpush1.msra.mxu0 0.0
    %251 = vmatprep.mubr.f32.mxu0 0.0
    %252 = vmatmul.mubr.f32.gmra.mrb[0].mxu0 %v185
    %v253 = vpop.f32.mrb[0].mxu0
    %v254 = vadd.f32 0.0, %v253
    %v255 = vpop.f32.mrb[0].mxu0
    %256 = vdwg.mxu0
    %vm257 = vcmask 130048
    %v259 = vsel %vm257, %v181, 0
    %261 = vmatprep.subr.mxu0 0.0
    %262 = vmatpush1.msra.mxu0 %v177
    %263 = vmatprep.subr.mxu0 0.0
    %264 = vmatpush1.msra.mxu0 %v178
    %265 = vmatprep.subr.mxu0 0.0
    %266 = vmatpush1.msra.mxu0 0.0
    %267 = vmatprep.subr.mxu0 0.0
    %268 = vmatpush1.msra.mxu0 0.0
    %269 = vmatprep.subr.mxu0 0.0
    %270 = vmatpush1.msra.mxu0 0.0
    %271 = vmatprep.subr.mxu0 0.0
    %272 = vmatpush1.msra.mxu0 0.0
    %273 = vmatprep.subr.mxu0 0.0
    %274 = vmatpush1.msra.mxu0 0.0
    %275 = vmatprep.subr.mxu0 0.0
    %276 = vmatpush1.msra.mxu0 0.0
    %277 = vmatprep.subr.mxu0 0.0
    %278 = vmatpush1.msra.mxu0 0.0
    %279 = vmatprep.subr.mxu0 0.0
    %280 = vmatpush1.msra.mxu0 0.0
    %281 = vmatprep.subr.mxu0 0.0
    %282 = vmatpush1.msra.mxu0 0.0
    %283 = vmatprep.subr.mxu0 0.0
    %284 = vmatpush1.msra.mxu0 0.0
    %285 = vmatprep.subr.mxu0 0.0
    %286 = vmatpush1.msra.mxu0 0.0
    %287 = vmatprep.subr.mxu0 0.0
    %288 = vmatpush1.msra.mxu0 0.0
    %289 = vmatprep.subr.mxu0 0.0
    %290 = vmatpush1.msra.mxu0 0.0
    %291 = vmatprep.subr.mxu0 0.0
    %292 = vmatpush1.msra.mxu0 0.0
    %293 = vmatprep.subr.mxu0 0.0
    %294 = vmatpush1.msra.mxu0 0.0
    %295 = vmatprep.subr.mxu0 0.0
    %296 = vmatpush1.msra.mxu0 0.0
    %297 = vmatprep.subr.mxu0 0.0
    %298 = vmatpush1.msra.mxu0 0.0
    %299 = vmatprep.subr.mxu0 0.0
    %300 = vmatpush1.msra.mxu0 0.0
    %301 = vmatprep.subr.mxu0 0.0
    %302 = vmatpush1.msra.mxu0 0.0
    %303 = vmatprep.subr.mxu0 0.0
    %304 = vmatpush1.msra.mxu0 0.0
    %305 = vmatprep.subr.mxu0 0.0
    %306 = vmatpush1.msra.mxu0 0.0
    %307 = vmatprep.subr.mxu0 0.0
    %308 = vmatpush1.msra.mxu0 0.0
    %309 = vmatprep.subr.mxu0 0.0
    %310 = vmatpush1.msra.mxu0 0.0
    %311 = vmatprep.subr.mxu0 0.0
    %312 = vmatpush1.msra.mxu0 0.0
    %313 = vmatprep.subr.mxu0 0.0
    %314 = vmatpush1.msra.mxu0 0.0
    %315 = vmatprep.subr.mxu0 0.0
    %316 = vmatpush1.msra.mxu0 0.0
    %317 = vmatprep.subr.mxu0 0.0
    %318 = vmatpush1.msra.mxu0 0.0
    %319 = vmatprep.subr.mxu0 0.0
    %320 = vmatpush1.msra.mxu0 0.0
    %321 = vmatprep.subr.mxu0 0.0
    %322 = vmatpush1.msra.mxu0 0.0
    %323 = vmatprep.subr.mxu0 0.0
    %324 = vmatpush1.msra.mxu0 0.0
    %325 = vmatprep.mubr.f32.mxu0 0.0
    %326 = vmatmul.mubr.f32.gmra.mrb[0].mxu0 %v259
    %v327 = vpop.f32.mrb[0].mxu0
    %v328 = vadd.f32 %v254, %v327
    %v329 = vpop.f32.mrb[0].mxu0
    %330 = vdwg.mxu0
    %v332 = vlaneseq
    %v333 = vshrl.u32 %v332, 7
    %v334 = vsub.s32 0, %v333
    %v335 = vrot.slane %v180, %v334
    %v337 = vadd.f32 %v328, %v335
    %v338 = vld [vmem:[#allocation10] sm:$0x1]
    %v339 = vld [vmem:[#allocation11] sm:$0x1]
    %vm340 = vcmask 261120
    %v341 = vsel %vm340, %v337, 0.0
    %342 = vadd.xlane.f32.xlu0 %v341
    %v343 = vpop.xlane.xlu0 %342
    %v344 = vmul.f32 %v343, 0.03125
    %v345 = vmul.f32 %v337, %v337
    %v346 = vsel %vm340, %v345, 0.0
    %347 = vadd.xlane.f32.xlu0 %v346
    %v348 = vpop.xlane.xlu0 %347
    %v349 = vmul.f32 %v348, 0.03125
    %v350 = vmul.f32 %v344, %v344
    %v351 = vsub.f32 %v349, %v350
    %v352 = vmax.f32 %v351, 0.0
    %v353 = vsub.f32 %v337, %v344
    %v354 = vadd.f32 %v352, 1e-05
    %v355 = vrsqrt.pop %v354
    %v357 = vlaneseq
    %v358 = vshrl.u32 %v357, 7
    %v359 = vsub.s32 0, %v358
    %v360 = vrot.slane %v338, %v359
    %v362 = vmul.f32 %v355, %v360
    %v363 = vmul.f32 %v353, %v362
    %v365 = vlaneseq
    %v366 = vshrl.u32 %v365, 7
    %v367 = vsub.s32 0, %v366
    %v368 = vrot.slane %v339, %v367
    %v370 = vadd.f32 %v363, %v368
    %v371 = vtanh.pop %v370
    %v372 = vld [vmem:[%s7] sm:$0xff]
    %v373 = vld [vmem:[%s7 + $0x8] sm:$0xff]
    %v374 = vld [vmem:[%s7 + $0x10] sm:$0xff]
    %v375 = vld [vmem:[%s7 + $0x18] sm:$0xff]
    %v376 = vld [vmem:[#allocation13] sm:$0x1]
    %v378 = vlaneseq
    %v379 = vshrl.u32 %v378, 7
    %v380 = vsub.s32 0, %v379
    %v381 = vrot.slane %v376, %v380
    %v384 = vsel %vm340, %v371, 0
    %386 = vmatprep.subr.mxu0 0.0
    %387 = vmatpush1.msra.mxu0 %v372
    %388 = vmatprep.subr.mxu0 0.0
    %389 = vmatpush1.msra.mxu0 %v373
    %390 = vmatprep.subr.mxu0 0.0
    %391 = vmatpush1.msra.mxu0 %v374
    %392 = vmatprep.subr.mxu0 0.0
    %393 = vmatpush1.msra.mxu0 %v375
    %394 = vmatprep.subr.mxu0 0.0
    %395 = vmatpush1.msra.mxu0 0.0
    %396 = vmatprep.subr.mxu0 0.0
    %397 = vmatpush1.msra.mxu0 0.0
    %398 = vmatprep.subr.mxu0 0.0
    %399 = vmatpush1.msra.mxu0 0.0
    %400 = vmatprep.subr.mxu0 0.0
    %401 = vmatpush1.msra.mxu0 0.0
    %402 = vmatprep.subr.mxu0 0.0
    %403 = vmatpush1.msra.mxu0 0.0
    %404 = vmatprep.subr.mxu0 0.0
    %405 = vmatpush1.msra.mxu0 0.0
    %406 = vmatprep.subr.mxu0 0.0
    %407 = vmatpush1.msra.mxu0 0.0
    %408 = vmatprep.subr.mxu0 0.0
    %409 = vmatpush1.msra.mxu0 0.0
    %410 = vmatprep.subr.mxu0 0.0
    %411 = vmatpush1.msra.mxu0 0.0
    %412 = vmatprep.subr.mxu0 0.0
    %413 = vmatpush1.msra.mxu0 0.0
    %414 = vmatprep.subr.mxu0 0.0
    %415 = vmatpush1.msra.mxu0 0.0
    %416 = vmatprep.subr.mxu0 0.0
    %417 = vmatpush1.msra.mxu0 0.0
    %418 = vmatprep.subr.mxu0 0.0
    %419 = vmatpush1.msra.mxu0 0.0
    %420 = vmatprep.subr.mxu0 0.0
    %421 = vmatpush1.msra.mxu0 0.0
    %422 = vmatprep.subr.mxu0 0.0
    %423 = vmatpush1.msra.mxu0 0.0
    %424 = vmatprep.subr.mxu0 0.0
    %425 = vmatpush1.msra.mxu0 0.0
    %426 = vmatprep.subr.mxu0 0.0
    %427 = vmatpush1.msra.mxu0 0.0
    %428 = vmatprep.subr.mxu0 0.0
    %429 = vmatpush1.msra.mxu0 0.0
    %430 = vmatprep.subr.mxu0 0.0
    %431 = vmatpush1.msra.mxu0 0.0
    %432 = vmatprep.subr.mxu0 0.0
    %433 = vmatpush1.msra.mxu0 0.0
    %434 = vmatprep.subr.mxu0 0.0
    %435 = vmatpush1.msra.mxu0 0.0
    %436 = vmatprep.subr.mxu0 0.0
    %437 = vmatpush1.msra.mxu0 0.0
    %438 = vmatprep.subr.mxu0 0.0
    %439 = vmatpush1.msra.mxu0 0.0
    %440 = vmatprep.subr.mxu0 0.0
    %441 = vmatpush1.msra.mxu0 0.0
    %442 = vmatprep.subr.mxu0 0.0
    %443 = vmatpush1.msra.mxu0 0.0
    %444 = vmatprep.subr.mxu0 0.0
    %445 = vmatpush1.msra.mxu0 0.0
    %446 = vmatprep.subr.mxu0 0.0
    %447 = vmatpush1.msra.mxu0 0.0
    %448 = vmatprep.subr.mxu0 0.0
    %449 = vmatpush1.msra.mxu0 0.0
    %450 = vmatprep.mubr.f32.mxu0 0.0
    %451 = vmatmul.mubr.f32.gmra.mrb[0].mxu0 %v384
    %v452 = vpop.f32.mrb[0].mxu0
    %v453 = vadd.f32 %v381, %v452
    %v454 = vpop.f32.mrb[0].mxu0
    %455 = vdwg.mxu0
    %v456 = vmax.f32 %v453, 0.0
    %v457 = vld [vmem:[%s9] sm:$0xff]
    %v458 = vld [vmem:[%s9 + $0x8] sm:$0xff]
    %v459 = vld [vmem:[%s9 + $0x10] sm:$0xff]
    %v460 = vld [vmem:[%s9 + $0x18] sm:$0xff]
    %v461 = vld [vmem:[#allocation14] sm:$0x1]
    %v463 = vlaneseq
    %v464 = vshrl.u32 %v463, 7
    %v465 = vsub.s32 0, %v464
    %v466 = vrot.slane %v461, %v465
    %v469 = vsel %vm340, %v456, 0
    %471 = vmatprep.subr.mxu0 0.0
    %472 = vmatpush1.msra.mxu0 %v457
    %473 = vmatprep.subr.mxu0 0.0
    %474 = vmatpush1.msra.mxu0 %v458
    %475 = vmatprep.subr.mxu0 0.0
    %476 = vmatpush1.msra.mxu0 %v459
    %477 = vmatprep.subr.mxu0 0.0
    %478 = vmatpush1.msra.mxu0 %v460
    %479 = vmatprep.subr.mxu0 0.0
    %480 = vmatpush1.msra.mxu0 0.0
    %481 = vmatprep.subr.mxu0 0.0
    %482 = vmatpush1.msra.mxu0 0.0
    %483 = vmatprep.subr.mxu0 0.0
    %484 = vmatpush1.msra.mxu0 0.0
    %485 = vmatprep.subr.mxu0 0.0
    %486 = vmatpush1.msra.mxu0 0.0
    %487 = vmatprep.subr.mxu0 0.0
    %488 = vmatpush1.msra.mxu0 0.0
    %489 = vmatprep.subr.mxu0 0.0
    %490 = vmatpush1.msra.mxu0 0.0
    %491 = vmatprep.subr.mxu0 0.0
    %492 = vmatpush1.msra.mxu0 0.0
    %493 = vmatprep.subr.mxu0 0.0
    %494 = vmatpush1.msra.mxu0 0.0
    %495 = vmatprep.subr.mxu0 0.0
    %496 = vmatpush1.msra.mxu0 0.0
    %497 = vmatprep.subr.mxu0 0.0
    %498 = vmatpush1.msra.mxu0 0.0
    %499 = vmatprep.subr.mxu0 0.0
    %500 = vmatpush1.msra.mxu0 0.0
    %501 = vmatprep.subr.mxu0 0.0
    %502 = vmatpush1.msra.mxu0 0.0
    %503 = vmatprep.subr.mxu0 0.0
    %504 = vmatpush1.msra.mxu0 0.0
    %505 = vmatprep.subr.mxu0 0.0
    %506 = vmatpush1.msra.mxu0 0.0
    %507 = vmatprep.subr.mxu0 0.0
    %508 = vmatpush1.msra.mxu0 0.0
    %509 = vmatprep.subr.mxu0 0.0
    %510 = vmatpush1.msra.mxu0 0.0
    %511 = vmatprep.subr.mxu0 0.0
    %512 = vmatpush1.msra.mxu0 0.0
    %513 = vmatprep.subr.mxu0 0.0
    %514 = vmatpush1.msra.mxu0 0.0
    %515 = vmatprep.subr.mxu0 0.0
    %516 = vmatpush1.msra.mxu0 0.0
    %517 = vmatprep.subr.mxu0 0.0
    %518 = vmatpush1.msra.mxu0 0.0
    %519 = vmatprep.subr.mxu0 0.0
    %520 = vmatpush1.msra.mxu0 0.0
    %521 = vmatprep.subr.mxu0 0.0
    %522 = vmatpush1.msra.mxu0 0.0
    %523 = vmatprep.subr.mxu0 0.0
    %524 = vmatpush1.msra.mxu0 0.0
    %525 = vmatprep.subr.mxu0 0.0
    %526 = vmatpush1.msra.mxu0 0.0
    %527 = vmatprep.subr.mxu0 0.0
    %528 = vmatpush1.msra.mxu0 0.0
    %529 = vmatprep.subr.mxu0 0.0
    %530 = vmatpush1.msra.mxu0 0.0
    %531 = vmatprep.subr.mxu0 0.0
    %532 = vmatpush1.msra.mxu0 0.0
    %533 = vmatprep.subr.mxu0 0.0
    %534 = vmatpush1.msra.mxu0 0.0
    %535 = vmatprep.mubr.f32.mxu0 0.0
    %536 = vmatmul.mubr.f32.gmra.mrb[0].mxu0 %v469
    %v537 = vpop.f32.mrb[0].mxu0
    %v538 = vadd.f32 %v466, %v537
    %v539 = vpop.f32.mrb[0].mxu0
    %540 = vdwg.mxu0
    %v541 = vld [vmem:[#allocation16] sm:$0xff]
    %v542 = vld [vmem:[#allocation16 + $0x8] sm:$0xff]
    %v543 = vld [vmem:[#allocation17] sm:$0x1]
    %v545 = vlaneseq
    %v546 = vshrl.u32 %v545, 7
    %v547 = vsub.s32 0, %v546
    %v548 = vrot.slane %v543, %v547
    %v551 = vsel %vm257, %v538, 0
    %553 = vmatprep.subr.mxu0 0.0
    %554 = vmatpush1.msra.mxu0 %v541
    %555 = vmatprep.subr.mxu0 0.0
    %556 = vmatpush1.msra.mxu0 %v542
    %557 = vmatprep.subr.mxu0 0.0
    %558 = vmatpush1.msra.mxu0 0.0
    %559 = vmatprep.subr.mxu0 0.0
    %560 = vmatpush1.msra.mxu0 0.0
    %561 = vmatprep.subr.mxu0 0.0
    %562 = vmatpush1.msra.mxu0 0.0
    %563 = vmatprep.subr.mxu0 0.0
    %564 = vmatpush1.msra.mxu0 0.0
    %565 = vmatprep.subr.mxu0 0.0
    %566 = vmatpush1.msra.mxu0 0.0
    %567 = vmatprep.subr.mxu0 0.0
    %568 = vmatpush1.msra.mxu0 0.0
    %569 = vmatprep.subr.mxu0 0.0
    %570 = vmatpush1.msra.mxu0 0.0
    %571 = vmatprep.subr.mxu0 0.0
    %572 = vmatpush1.msra.mxu0 0.0
    %573 = vmatprep.subr.mxu0 0.0
    %574 = vmatpush1.msra.mxu0 0.0
    %575 = vmatprep.subr.mxu0 0.0
    %576 = vmatpush1.msra.mxu0 0.0
    %577 = vmatprep.subr.mxu0 0.0
    %578 = vmatpush1.msra.mxu0 0.0
    %579 = vmatprep.subr.mxu0 0.0
    %580 = vmatpush1.msra.mxu0 0.0
    %581 = vmatprep.subr.mxu0 0.0
    %582 = vmatpush1.msra.mxu0 0.0
    %583 = vmatprep.subr.mxu0 0.0
    %584 = vmatpush1.msra.mxu0 0.0
    %585 = vmatprep.subr.mxu0 0.0
    %586 = vmatpush1.msra.mxu0 0.0
    %587 = vmatprep.subr.mxu0 0.0
    %588 = vmatpush1.msra.mxu0 0.0
    %589 = vmatprep.subr.mxu0 0.0
    %590 = vmatpush1.msra.mxu0 0.0
    %591 = vmatprep.subr.mxu0 0.0
    %592 = vmatpush1.msra.mxu0 0.0
    %593 = vmatprep.subr.mxu0 0.0
    %594 = vmatpush1.msra.mxu0 0.0
    %595 = vmatprep.subr.mxu0 0.0
    %596 = vmatpush1.msra.mxu0 0.0
    %597 = vmatprep.subr.mxu0 0.0
    %598 = vmatpush1.msra.mxu0 0.0
    %599 = vmatprep.subr.mxu0 0.0
    %600 = vmatpush1.msra.mxu0 0.0
    %601 = vmatprep.subr.mxu0 0.0
    %602 = vmatpush1.msra.mxu0 0.0
    %603 = vmatprep.subr.mxu0 0.0
    %604 = vmatpush1.msra.mxu0 0.0
    %605 = vmatprep.subr.mxu0 0.0
    %606 = vmatpush1.msra.mxu0 0.0
    %607 = vmatprep.subr.mxu0 0.0
    %608 = vmatpush1.msra.mxu0 0.0
    %609 = vmatprep.subr.mxu0 0.0
    %610 = vmatpush1.msra.mxu0 0.0
    %611 = vmatprep.subr.mxu0 0.0
    %612 = vmatpush1.msra.mxu0 0.0
    %613 = vmatprep.subr.mxu0 0.0
    %614 = vmatpush1.msra.mxu0 0.0
    %615 = vmatprep.subr.mxu0 0.0
    %616 = vmatpush1.msra.mxu0 0.0
    %617 = vmatprep.mubr.f32.mxu0 0.0
    %618 = vmatmul.mubr.f32.gmra.mrb[0].mxu0 %v551
    %v619 = vpop.f32.mrb[0].mxu0
    %v620 = vadd.f32 %v548, %v619
    %v621 = vpop.f32.mrb[0].mxu0
    %622 = vdwg.mxu0
    %v623 = vmax.f32 %v620, 0.0
    %v624 = vld [vmem:[%s13] sm:$0xff]
    %v625 = vld [vmem:[%s13 + $0x8] sm:$0xff]
    %v626 = vld [vmem:[%s13 + $0x10] sm:$0xff]
    %v627 = vld [vmem:[%s13 + $0x18] sm:$0xff]
    %v628 = vld [vmem:[%s14] sm:$0x1]
    %v630 = vlaneseq
    %v631 = vshrl.u32 %v630, 7
    %v632 = vsub.s32 0, %v631
    %v633 = vrot.slane %v628, %v632
    %v636 = vsel %vm340, %v623, 0
    %638 = vmatprep.subr.mxu0 0.0
    %639 = vmatpush1.msra.mxu0 %v624
    %640 = vmatprep.subr.mxu0 0.0
    %641 = vmatpush1.msra.mxu0 %v625
    %642 = vmatprep.subr.mxu0 0.0
    %643 = vmatpush1.msra.mxu0 %v626
    %644 = vmatprep.subr.mxu0 0.0
    %645 = vmatpush1.msra.mxu0 %v627
    %646 = vmatprep.subr.mxu0 0.0
    %647 = vmatpush1.msra.mxu0 0.0
    %648 = vmatprep.subr.mxu0 0.0
    %649 = vmatpush1.msra.mxu0 0.0
    %650 = vmatprep.subr.mxu0 0.0
    %651 = vmatpush1.msra.mxu0 0.0
    %652 = vmatprep.subr.mxu0 0.0
    %653 = vmatpush1.msra.mxu0 0.0
    %654 = vmatprep.subr.mxu0 0.0
    %655 = vmatpush1.msra.mxu0 0.0
    %656 = vmatprep.subr.mxu0 0.0
    %657 = vmatpush1.msra.mxu0 0.0
    %658 = vmatprep.subr.mxu0 0.0
    %659 = vmatpush1.msra.mxu0 0.0
    %660 = vmatprep.subr.mxu0 0.0
    %661 = vmatpush1.msra.mxu0 0.0
    %662 = vmatprep.subr.mxu0 0.0
    %663 = vmatpush1.msra.mxu0 0.0
    %664 = vmatprep.subr.mxu0 0.0
    %665 = vmatpush1.msra.mxu0 0.0
    %666 = vmatprep.subr.mxu0 0.0
    %667 = vmatpush1.msra.mxu0 0.0
    %668 = vmatprep.subr.mxu0 0.0
    %669 = vmatpush1.msra.mxu0 0.0
    %670 = vmatprep.subr.mxu0 0.0
    %671 = vmatpush1.msra.mxu0 0.0
    %672 = vmatprep.subr.mxu0 0.0
    %673 = vmatpush1.msra.mxu0 0.0
    %674 = vmatprep.subr.mxu0 0.0
    %675 = vmatpush1.msra.mxu0 0.0
    %676 = vmatprep.subr.mxu0 0.0
    %677 = vmatpush1.msra.mxu0 0.0
    %678 = vmatprep.subr.mxu0 0.0
    %679 = vmatpush1.msra.mxu0 0.0
    %680 = vmatprep.subr.mxu0 0.0
    %681 = vmatpush1.msra.mxu0 0.0
    %682 = vmatprep.subr.mxu0 0.0
    %683 = vmatpush1.msra.mxu0 0.0
    %684 = vmatprep.subr.mxu0 0.0
    %685 = vmatpush1.msra.mxu0 0.0
    %686 = vmatprep.subr.mxu0 0.0
    %687 = vmatpush1.msra.mxu0 0.0
    %688 = vmatprep.subr.mxu0 0.0
    %689 = vmatpush1.msra.mxu0 0.0
    %690 = vmatprep.subr.mxu0 0.0
    %691 = vmatpush1.msra.mxu0 0.0
    %692 = vmatprep.subr.mxu0 0.0
    %693 = vmatpush1.msra.mxu0 0.0
    %694 = vmatprep.subr.mxu0 0.0
    %695 = vmatpush1.msra.mxu0 0.0
    %696 = vmatprep.subr.mxu0 0.0
    %697 = vmatpush1.msra.mxu0 0.0
    %698 = vmatprep.subr.mxu0 0.0
    %699 = vmatpush1.msra.mxu0 0.0
    %700 = vmatprep.subr.mxu0 0.0
    %701 = vmatpush1.msra.mxu0 0.0
    %702 = vmatprep.mubr.f32.mxu0 0.0
    %703 = vmatmul.mubr.f32.gmra.mrb[0].mxu0 %v636
    %v704 = vpop.f32.mrb[0].mxu0
    %v705 = vadd.f32 %v633, %v704
    %v706 = vpop.f32.mrb[0].mxu0
    %707 = vdwg.mxu0
    %v708 = vmax.f32 %v705, 0.0
    %v709 = vld [vmem:[%s15] sm:$0xff]
    %v710 = vld [vmem:[%s15 + $0x8] sm:$0xff]
    %v711 = vld [vmem:[%s15 + $0x10] sm:$0xff]
    %v712 = vld [vmem:[%s15 + $0x18] sm:$0xff]
    %v713 = vld [vmem:[%s16] sm:$0x1]
    %v715 = vlaneseq
    %v716 = vshrl.u32 %v715, 7
    %v717 = vsub.s32 0, %v716
    %v718 = vrot.slane %v713, %v717
    %v721 = vsel %vm340, %v708, 0
    %723 = vmatprep.subr.mxu0 0.0
    %724 = vmatpush1.msra.mxu0 %v709
    %725 = vmatprep.subr.mxu0 0.0
    %726 = vmatpush1.msra.mxu0 %v710
    %727 = vmatprep.subr.mxu0 0.0
    %728 = vmatpush1.msra.mxu0 %v711
    %729 = vmatprep.subr.mxu0 0.0
    %730 = vmatpush1.msra.mxu0 %v712
    %731 = vmatprep.subr.mxu0 0.0
    %732 = vmatpush1.msra.mxu0 0.0
    %733 = vmatprep.subr.mxu0 0.0
    %734 = vmatpush1.msra.mxu0 0.0
    %735 = vmatprep.subr.mxu0 0.0
    %736 = vmatpush1.msra.mxu0 0.0
    %737 = vmatprep.subr.mxu0 0.0
    %738 = vmatpush1.msra.mxu0 0.0
    %739 = vmatprep.subr.mxu0 0.0
    %740 = vmatpush1.msra.mxu0 0.0
    %741 = vmatprep.subr.mxu0 0.0
    %742 = vmatpush1.msra.mxu0 0.0
    %743 = vmatprep.subr.mxu0 0.0
    %744 = vmatpush1.msra.mxu0 0.0
    %745 = vmatprep.subr.mxu0 0.0
    %746 = vmatpush1.msra.mxu0 0.0
    %747 = vmatprep.subr.mxu0 0.0
    %748 = vmatpush1.msra.mxu0 0.0
    %749 = vmatprep.subr.mxu0 0.0
    %750 = vmatpush1.msra.mxu0 0.0
    %751 = vmatprep.subr.mxu0 0.0
    %752 = vmatpush1.msra.mxu0 0.0
    %753 = vmatprep.subr.mxu0 0.0
    %754 = vmatpush1.msra.mxu0 0.0
    %755 = vmatprep.subr.mxu0 0.0
    %756 = vmatpush1.msra.mxu0 0.0
    %757 = vmatprep.subr.mxu0 0.0
    %758 = vmatpush1.msra.mxu0 0.0
    %759 = vmatprep.subr.mxu0 0.0
    %760 = vmatpush1.msra.mxu0 0.0
    %761 = vmatprep.subr.mxu0 0.0
    %762 = vmatpush1.msra.mxu0 0.0
    %763 = vmatprep.subr.mxu0 0.0
    %764 = vmatpush1.msra.mxu0 0.0
    %765 = vmatprep.subr.mxu0 0.0
    %766 = vmatpush1.msra.mxu0 0.0
    %767 = vmatprep.subr.mxu0 0.0
    %768 = vmatpush1.msra.mxu0 0.0
    %769 = vmatprep.subr.mxu0 0.0
    %770 = vmatpush1.msra.mxu0 0.0
    %771 = vmatprep.subr.mxu0 0.0
    %772 = vmatpush1.msra.mxu0 0.0
    %773 = vmatprep.subr.mxu0 0.0
    %774 = vmatpush1.msra.mxu0 0.0
    %775 = vmatprep.subr.mxu0 0.0
    %776 = vmatpush1.msra.mxu0 0.0
    %777 = vmatprep.subr.mxu0 0.0
    %778 = vmatpush1.msra.mxu0 0.0
    %779 = vmatprep.subr.mxu0 0.0
    %780 = vmatpush1.msra.mxu0 0.0
    %781 = vmatprep.subr.mxu0 0.0
    %782 = vmatpush1.msra.mxu0 0.0
    %783 = vmatprep.subr.mxu0 0.0
    %784 = vmatpush1.msra.mxu0 0.0
    %785 = vmatprep.subr.mxu0 0.0
    %786 = vmatpush1.msra.mxu0 0.0
    %787 = vmatprep.mubr.f32.mxu0 0.0
    %788 = vmatmul.mubr.f32.gmra.mrb[0].mxu0 %v721
    %v789 = vpop.f32.mrb[0].mxu0
    %v790 = vadd.f32 %v718, %v789
    %v791 = vpop.f32.mrb[0].mxu0
    %792 = vdwg.mxu0
    %793 = vst [vmem:[#allocation19] sm:$0xff] %v790
    // Predicated region
    $region110: #{tpu_custom_call.1} parent=1 // pred_check
      _
    $region111: #{tpu_custom_call.1} parent=1 // pred_check_branch
      %795 = sbr.rel (0) target = $region113
    $region112: #{tpu_custom_call.1} parent=1 // pred_region
      %s797 = ssub.s32 128, 128
      %798 = vsyncadd [#allocation4], %s797
      %s800 = sshll.u32 [#allocation19], 4
      %s801 = int_to_ptr.vmem [resolvable:$true] %s800
      %803 = dma.vmem_to_hbm [thread:$0]  %s801, 128, %s17, [#allocation4]
    $region113: #{tpu_custom_call.1} parent=1 // pred_fallthru
      _
    // Predicated region
    $region114: #{tpu_custom_call.1} parent=1 // pred_check
      _
    $region115: #{tpu_custom_call.1} parent=1 // pred_check_branch
      %805 = sbr.rel (0) target = $region117
    $region116: #{tpu_custom_call.1} parent=1 // pred_region
      %806 = dma.done [#allocation4], 128
    $region117: #{tpu_custom_call.1} parent=1 // pred_fallthru
      _
    %807 = vsyncpa [#allocation3], 1
    %808 = vsyncpa [#allocation6], 1
    %809 = vsyncpa [#allocation9], 1
    %810 = vsyncpa [#allocation12], 1
    %811 = vsyncpa [#allocation15], 1
    %812 = vsyncpa [#allocation18], 1
    %813 = vsyncpa [#allocation4], 1

</llo_original>
